<compile_context>
chip_gen: v7x
topology: tpu7x:2x2x1
jax: 0.10.0
libtpu: 0.0.40
codegen_flags: <defaults>
</compile_context>

<pallas_src>
import functools

import jax
import jax.numpy as jnp
from jax import lax
from jax.experimental import pallas as pl
from jax.experimental.pallas import tpu as pltpu


def _round_up(x: int, m: int) -> int:
    return ((x + m - 1) // m) * m


def _dipole_kernel(pos_ref, q_ref, batch_ref, out_ref, acc_ref, iota_ref, *,
                   n, tn, num_graphs, tiles_per_split):
    s = pl.program_id(0)               # split axis ("parallel")
    j = pl.program_id(1)               # node-tile axis within split ("arbitrary")
    t = s * tiles_per_split + j        # global node-tile index
    full_tiles = n // tn               # tiles with no ragged tail (static int)

    @pl.when(j == 0)
    def _init():
        acc_ref[...] = jnp.zeros_like(acc_ref)
        # Hoisted: built once per split, reused by every tile (JAX does not CSE
        # broadcast_in_dim, and the pipelined grid re-runs the body).
        iota_ref[...] = lax.broadcasted_iota(jnp.int32, (num_graphs, tn), 0)

    b = batch_ref[...]                          # (1, tn) int32 graph id per node
    qv = q_ref[...].astype(jnp.float32)         # (1, tn) per-node charge
    onehot = b == iota_ref[...]                 # (num_graphs, tn) bool, lane-dense

    def accumulate(w, pos_t):
        # scatter_sum as an NT contraction over the node (lane) axis:
        #   acc[g, d] += sum_n w[g, n] * pos_t[d, n]
        acc_ref[...] += lax.dot_general(
            w, pos_t,
            dimension_numbers=(((1,), (1,)), ((), ())),
            preferred_element_type=jnp.float32,
            precision=lax.Precision.HIGHEST,
        )

    # Fast path: tile lies fully inside the valid node range -> no masking.
    @pl.when(t < full_tiles)
    def _full_tile():
        w = jnp.where(onehot, qv, 0.0)          # (num_graphs, tn)
        accumulate(w, pos_ref[...].astype(jnp.float32))

    # Slow path: ragged last tile (and over-covered tiles when the tile count
    # is rounded up for splits).  Mask by *global node index* with selects so
    # stale-VMEM garbage in the unread tail can never leak into the result.
    @pl.when(t >= full_tiles)
    def _ragged_tile():
        lane = lax.broadcasted_iota(jnp.int32, (1, tn), 1)
        valid = (t * tn + lane) < n                           # (1, tn) lane mask
        qv_m = jnp.where(valid, qv, 0.0)                      # fold mask into q
        w = jnp.where(onehot, qv_m, 0.0)                      # (num_graphs, tn)
        pos_t = jnp.where(valid, pos_ref[...].astype(jnp.float32), 0.0)  # (d, tn)
        accumulate(w, pos_t)

    @pl.when(j == pl.num_programs(1) - 1)
    def _finalize():
        out_ref[0] = acc_ref[...].astype(out_ref.dtype)


def _default_num_splits() -> int:
    # Two TensorCores per chip only on v7x; elsewhere splits just add overhead.
    try:
        kind = jax.devices()[0].device_kind.lower()
        if "v7" in kind or "7x" in kind:
            return 2
    except Exception:
        pass
    return 1


def dipoles_forward(data, num_graphs, *, feature_key="q", tn=8192, num_splits=None):
    """JAX/Pallas equivalent of Dipoles.forward.

    data: dict with
      'positions': (N, 3) float
      feature_key: (N, 1) or (N,) float per-node charge
      'batch':     (N,)  int graph index per node
    Returns a new dict with 'pred_dipole': (num_graphs, 3) added.

    Out-of-range batch indices are silently dropped (same as segment_sum).
    """
    positions = data["positions"]
    q = data[feature_key]
    batch = data["batch"].astype(jnp.int32)

    n, d = positions.shape
    out_dtype = positions.dtype

    out_data = dict(data)
    if n == 0:  # empty grid would leave the output uninitialized
        out_data["pred_dipole"] = jnp.zeros((num_graphs, d), out_dtype)
        return out_data

    if q.size != n:
        # TODO(synk): support per-axis features q of shape (N, 3); the common
        # Dipoles use case is a scalar charge per atom.
        raise NotImplementedError("feature must have one value per node")

    if num_splits is None:
        num_splits = _default_num_splits()

    # ---- node tile (lanes): large, multiple of 128, capped by an explicit
    # VMEM budget.  Per node (lane) we hold roughly:
    #   positions (3,tn)->(8,tn) f32, 2 buffers : 64 B
    #   q         (1,tn)->(8,tn) f32, 2 buffers : 64 B
    #   batch     (1,tn)->(8,tn) i32, 2 buffers : 64 B
    #   graph-iota scratch + onehot/w temps     : ~16 B * round_up(G, 8)
    g_pad = _round_up(max(num_graphs, 1), 8)
    per_node_bytes = 192 + 16 * g_pad
    vmem_budget = 20 * 1024 * 1024
    cap = max(128, vmem_budget // per_node_bytes)
    tn = min(int(tn), cap, _round_up(n, 128))
    tn = max(128, (tn // 128) * 128)

    num_tiles = pl.cdiv(n, tn)
    num_splits = max(1, min(int(num_splits), num_tiles))
    tiles_per_split = pl.cdiv(num_tiles, num_splits)

    # Node axis on lanes for every streamed array.  The positions transpose is
    # a one-time (N,3)->(3,N) HBM reshuffle; it is what makes the per-tile
    # block lane-dense (32*tn B instead of 512*tn B) and unlocks large tn.
    pos_t = positions.T.astype(out_dtype)        # (d, N)
    q2d = q.reshape(1, n)
    batch2d = batch.reshape(1, n)

    def node_block(s, j):
        # Clamp so over-covered tiles (from rounding num_tiles up to splits)
        # still map to a valid block; the in-kernel lane mask zeroes them.
        return jnp.minimum(s * tiles_per_split + j, num_tiles - 1)

    kernel = functools.partial(
        _dipole_kernel,
        n=n, tn=tn, num_graphs=num_graphs, tiles_per_split=tiles_per_split,
    )

    cost = pl.CostEstimate(
        flops=2 * n * num_graphs * d,
        transcendentals=0,
        bytes_accessed=n * (d * 4 + 4 + 4) + num_splits * num_graphs * d * 4,
    )

    partials = pl.pallas_call(
        kernel,
        out_shape=jax.ShapeDtypeStruct((num_splits, num_graphs, d), out_dtype),
        grid_spec=pltpu.PrefetchScalarGridSpec(
            num_scalar_prefetch=0,
            grid=(num_splits, tiles_per_split),
            in_specs=[
                pl.BlockSpec((d, tn), lambda s, j: (0, node_block(s, j))),  # positions^T
                pl.BlockSpec((1, tn), lambda s, j: (0, node_block(s, j))),  # q
                pl.BlockSpec((1, tn), lambda s, j: (0, node_block(s, j))),  # batch
            ],
            out_specs=pl.BlockSpec((1, num_graphs, d), lambda s, j: (s, 0, 0)),
            scratch_shapes=[
                pltpu.VMEM((num_graphs, d), jnp.float32),   # accumulator
                pltpu.VMEM((num_graphs, tn), jnp.int32),    # hoisted graph iota
            ],
        ),
        compiler_params=pltpu.CompilerParams(
            dimension_semantics=("parallel", "arbitrary"),
            vmem_limit_bytes=32 * 1024 * 1024,
        ),
        cost_estimate=cost,
    )(pos_t, q2d, batch2d)

    pred = partials[0] if num_splits == 1 else jnp.sum(partials, axis=0)
    out_data["pred_dipole"] = pred
    return out_data


if __name__ == "__main__":
    key = jax.random.PRNGKey(0)
    k_pos, k_q, k_b, k_pos2, k_q2 = jax.random.split(key, 5)

    # --- Test 1: small batched molecular graph (module-typical shapes) -----
    n_nodes, num_graphs = 16, 2
    positions = jax.random.normal(k_pos, (n_nodes, 3), dtype=jnp.float32)
    q = jax.random.normal(k_q, (n_nodes, 1), dtype=jnp.float32)
    batch = jnp.concatenate(
        [jnp.zeros((7,), jnp.int32), jnp.ones((9,), jnp.int32)], axis=0
    )
    data = {"positions": positions, "q": q, "batch": batch}

    out = dipoles_forward(data, num_graphs)
    pred = jax.block_until_ready(out["pred_dipole"])
    ref = jax.ops.segment_sum(positions * q, batch, num_segments=num_graphs)
    assert pred.shape == (num_graphs, 3)
    assert jnp.allclose(pred, ref, atol=1e-5, rtol=1e-5), (pred, ref)

    # --- Test 2: multi-tile reduction, ragged last tile, 2-way split -------
    n2, g2 = 1037, 5
    pos2 = jax.random.normal(k_pos2, (n2, 3), dtype=jnp.float32)
    q2 = jax.random.normal(k_q2, (n2, 1), dtype=jnp.float32)
    b2 = jax.random.randint(k_b, (n2,), 0, g2, dtype=jnp.int32)
    data2 = {"positions": pos2, "q": q2, "batch": b2}

    out2 = dipoles_forward(data2, g2, tn=256, num_splits=2)
    pred2 = jax.block_until_ready(out2["pred_dipole"])
    ref2 = jax.ops.segment_sum(pos2 * q2, b2, num_segments=g2)
    assert pred2.shape == (g2, 3)
    assert jnp.allclose(pred2, ref2, atol=1e-4, rtol=1e-5), (pred2, ref2)

    # --- Test 3: default (large) tile path, single ragged tile -------------
    out3 = dipoles_forward(data2, g2)
    pred3 = jax.block_until_ready(out3["pred_dipole"])
    assert jnp.allclose(pred3, ref2, atol=1e-4, rtol=1e-5), (pred3, ref2)

    print("KERNEL_OK")
</pallas_src>

<mosaic_0001>
module attributes {stable_mosaic.version = 11 : i64} {
  func.func @_dipole_kernel(%arg0: i32, %arg1: i32, %arg2: memref<3x128xf32, #tpu.memory_space<vmem>>, %arg3: memref<1x128xf32, #tpu.memory_space<vmem>>, %arg4: memref<1x128xi32, #tpu.memory_space<vmem>>, %arg5: memref<1x2x3xf32, #tpu.memory_space<vmem>>, %arg6: memref<2x3xf32, #tpu.memory_space<vmem>>, %arg7: memref<2x128xi32, #tpu.memory_space<vmem>>) attributes {dimension_semantics = [#tpu.dimension_semantics<parallel>, #tpu.dimension_semantics<arbitrary>], iteration_bounds = array<i64: 1, 1>, scalar_prefetch = 0 : i64, scratch_operands = 2 : i64, tpu.core_type = #tpu.core_type<tc>, window_params = [{transform_indices = @transform_0, window_bounds = array<i64: 3, 128>}, {transform_indices = @transform_1, window_bounds = array<i64: 1, 128>}, {transform_indices = @transform_2, window_bounds = array<i64: 1, 128>}, {transform_indices = @transform_3, window_bounds = array<i64: 1, 2, 3>}]} {
    %c1_i32 = arith.constant 1 : i32
    %0 = arith.muli %arg0, %c1_i32 : i32
    %1 = arith.addi %0, %arg1 : i32
    %c0_i32 = arith.constant 0 : i32
    %2 = arith.cmpi eq, %arg1, %c0_i32 : i32
    %3 = arith.extui %2 : i1 to i32
    %c0_i32_0 = arith.constant 0 : i32
    %4 = arith.cmpi ne, %3, %c0_i32_0 : i32
    scf.if %4 {
      %cst = arith.constant 0.000000e+00 : f32
      %19 = vector.broadcast %cst : f32 to vector<2x3xf32>
      %c0_12 = arith.constant 0 : index
      %c0_13 = arith.constant 0 : index
      %20 = vector.load %arg6[%c0_12, %c0_13] : memref<2x3xf32, #tpu.memory_space<vmem>>, vector<2x3xf32>
      tpu.vector_store %arg6[%c0_12, %c0_13], %19 {strides = array<i32>} : memref<2x3xf32, #tpu.memory_space<vmem>>, vector<2x3xf32>,
      %21 = tpu.iota {dimensions = array<i32: 0>} : vector<2x128xi32>
      %c0_14 = arith.constant 0 : index
      %c0_15 = arith.constant 0 : index
      %22 = vector.load %arg7[%c0_14, %c0_15] : memref<2x128xi32, #tpu.memory_space<vmem>>, vector<2x128xi32>
      tpu.vector_store %arg7[%c0_14, %c0_15], %21 {strides = array<i32>} : memref<2x128xi32, #tpu.memory_space<vmem>>, vector<2x128xi32>,
    } else {
    }
    %c0 = arith.constant 0 : index
    %c0_1 = arith.constant 0 : index
    %5 = vector.load %arg4[%c0, %c0_1] : memref<1x128xi32, #tpu.memory_space<vmem>>, vector<1x128xi32>
    %c0_2 = arith.constant 0 : index
    %c0_3 = arith.constant 0 : index
    %6 = vector.load %arg3[%c0_2, %c0_3] : memref<1x128xf32, #tpu.memory_space<vmem>>, vector<1x128xf32>
    %c0_4 = arith.constant 0 : index
    %c0_5 = arith.constant 0 : index
    %7 = vector.load %arg7[%c0_4, %c0_5] : memref<2x128xi32, #tpu.memory_space<vmem>>, vector<2x128xi32>
    %8 = vector.broadcast %5 : vector<1x128xi32> to vector<2x128xi32>
    %9 = arith.cmpi eq, %8, %7 : vector<2x128xi32>
    %c0_i32_6 = arith.constant 0 : i32
    %10 = arith.cmpi slt, %1, %c0_i32_6 : i32
    %11 = arith.extui %10 : i1 to i32
    %c0_i32_7 = arith.constant 0 : i32
    %12 = arith.cmpi ne, %11, %c0_i32_7 : i32
    scf.if %12 {
      %cst = arith.constant 0.000000e+00 : f32
      %19 = vector.shape_cast %6 : vector<1x128xf32> to vector<1x128xf32>
      %20 = vector.broadcast %19 : vector<1x128xf32> to vector<2x128xf32>
      %21 = vector.broadcast %cst : f32 to vector<2x128xf32>
      %22 = arith.select %9, %20, %21 : vector<2x128xi1>, vector<2x128xf32>
      %c0_12 = arith.constant 0 : index
      %c0_13 = arith.constant 0 : index
      %23 = vector.load %arg2[%c0_12, %c0_13] : memref<3x128xf32, #tpu.memory_space<vmem>>, vector<3x128xf32>
      %c0_14 = arith.constant 0 : index
      %c0_15 = arith.constant 0 : index
      %24 = vector.load %arg6[%c0_14, %c0_15] : memref<2x3xf32, #tpu.memory_space<vmem>>, vector<2x3xf32>
      %cst_16 = arith.constant dense<0.000000e+00> : vector<2x3xf32>
      %25 = tpu.matmul %22, %23, %cst_16 {dimension_numbers = #tpu.dot_dimension_numbers<[1], [1], [0], [0], [0, 0, 1, 0], [], []>, precision = #tpu.contract_precision<fp32>} : vector<2x128xf32>, vector<3x128xf32>, vector<2x3xf32> -> vector<2x3xf32>
      %26 = arith.addf %24, %25 : vector<2x3xf32>
      %c0_17 = arith.constant 0 : index
      %c0_18 = arith.constant 0 : index
      %27 = vector.load %arg6[%c0_17, %c0_18] : memref<2x3xf32, #tpu.memory_space<vmem>>, vector<2x3xf32>
      tpu.vector_store %arg6[%c0_17, %c0_18], %26 {strides = array<i32>} : memref<2x3xf32, #tpu.memory_space<vmem>>, vector<2x3xf32>,
    } else {
    }
    %c0_i32_8 = arith.constant 0 : i32
    %13 = arith.cmpi sge, %1, %c0_i32_8 : i32
    %14 = arith.extui %13 : i1 to i32
    %c0_i32_9 = arith.constant 0 : i32
    %15 = arith.cmpi ne, %14, %c0_i32_9 : i32
    scf.if %15 {
      %19 = tpu.iota {dimensions = array<i32: 1>} : vector<1x128xi32>
      %c128_i32 = arith.constant 128 : i32
      %20 = arith.muli %1, %c128_i32 : i32
      %21 = vector.broadcast %20 : i32 to vector<1x128xi32>
      %22 = arith.addi %21, %19 : vector<1x128xi32>
      %c16_i32 = arith.constant 16 : i32
      %23 = vector.broadcast %c16_i32 : i32 to vector<1x128xi32>
      %24 = arith.cmpi slt, %22, %23 : vector<1x128xi32>
      %cst = arith.constant 0.000000e+00 : f32
      %25 = vector.broadcast %cst : f32 to vector<1x128xf32>
      %26 = arith.select %24, %6, %25 : vector<1x128xi1>, vector<1x128xf32>
      %cst_12 = arith.constant 0.000000e+00 : f32
      %27 = vector.shape_cast %26 : vector<1x128xf32> to vector<1x128xf32>
      %28 = vector.broadcast %27 : vector<1x128xf32> to vector<2x128xf32>
      %29 = vector.broadcast %cst_12 : f32 to vector<2x128xf32>
      %30 = arith.select %9, %28, %29 : vector<2x128xi1>, vector<2x128xf32>
      %c0_13 = arith.constant 0 : index
      %c0_14 = arith.constant 0 : index
      %31 = vector.load %arg2[%c0_13, %c0_14] : memref<3x128xf32, #tpu.memory_space<vmem>>, vector<3x128xf32>
      %cst_15 = arith.constant 0.000000e+00 : f32
      %32 = vector.shape_cast %24 : vector<1x128xi1> to vector<1x128xi1>
      %33 = vector.broadcast %32 : vector<1x128xi1> to vector<3x128xi1>
      %34 = vector.broadcast %cst_15 : f32 to vector<3x128xf32>
      %35 = arith.select %33, %31, %34 : vector<3x128xi1>, vector<3x128xf32>
      %c0_16 = arith.constant 0 : index
      %c0_17 = arith.constant 0 : index
      %36 = vector.load %arg6[%c0_16, %c0_17] : memref<2x3xf32, #tpu.memory_space<vmem>>, vector<2x3xf32>
      %cst_18 = arith.constant dense<0.000000e+00> : vector<2x3xf32>
      %37 = tpu.matmul %30, %35, %cst_18 {dimension_numbers = #tpu.dot_dimension_numbers<[1], [1], [0], [0], [0, 0, 1, 0], [], []>, precision = #tpu.contract_precision<fp32>} : vector<2x128xf32>, vector<3x128xf32>, vector<2x3xf32> -> vector<2x3xf32>
      %38 = arith.addf %36, %37 : vector<2x3xf32>
      %c0_19 = arith.constant 0 : index
      %c0_20 = arith.constant 0 : index
      %39 = vector.load %arg6[%c0_19, %c0_20] : memref<2x3xf32, #tpu.memory_space<vmem>>, vector<2x3xf32>
      tpu.vector_store %arg6[%c0_19, %c0_20], %38 {strides = array<i32>} : memref<2x3xf32, #tpu.memory_space<vmem>>, vector<2x3xf32>,
    } else {
    }
    %c0_i32_10 = arith.constant 0 : i32
    %16 = arith.cmpi eq, %arg1, %c0_i32_10 : i32
    %17 = arith.extui %16 : i1 to i32
    %c0_i32_11 = arith.constant 0 : i32
    %18 = arith.cmpi ne, %17, %c0_i32_11 : i32
    scf.if %18 {
      %c0_12 = arith.constant 0 : index
      %c0_13 = arith.constant 0 : index
      %19 = vector.load %arg6[%c0_12, %c0_13] : memref<2x3xf32, #tpu.memory_space<vmem>>, vector<2x3xf32>
      %c0_14 = arith.constant 0 : index
      %c0_15 = arith.constant 0 : index
      %c0_16 = arith.constant 0 : index
      %20 = vector.load %arg5[%c0_14, %c0_15, %c0_16] : memref<1x2x3xf32, #tpu.memory_space<vmem>>, vector<1x2x3xf32>
      %21 = vector.shape_cast %20 : vector<1x2x3xf32> to vector<2x3xf32>
      %22 = vector.shape_cast %19 : vector<2x3xf32> to vector<1x2x3xf32>
      tpu.vector_store %arg5[%c0_14, %c0_15, %c0_16], %22 {strides = array<i32>} : memref<1x2x3xf32, #tpu.memory_space<vmem>>, vector<1x2x3xf32>,
    } else {
    }
    return
  }
  func.func @transform_0(%arg0: i32, %arg1: i32) -> (i32, i32) {
    %c1_i32 = arith.constant 1 : i32
    %0 = arith.muli %arg0, %c1_i32 : i32
    %1 = arith.addi %0, %arg1 : i32
    %c0_i32 = arith.constant 0 : i32
    %2 = arith.minsi %1, %c0_i32 : i32
    %c0_i32_0 = arith.constant 0 : i32
    %c0_i32_1 = arith.constant 0 : i32
    return %c0_i32_0, %2 : i32, i32
  }
  func.func @transform_1(%arg0: i32, %arg1: i32) -> (i32, i32) {
    %c1_i32 = arith.constant 1 : i32
    %0 = arith.muli %arg0, %c1_i32 : i32
    %1 = arith.addi %0, %arg1 : i32
    %c0_i32 = arith.constant 0 : i32
    %2 = arith.minsi %1, %c0_i32 : i32
    %c0_i32_0 = arith.constant 0 : i32
    %c0_i32_1 = arith.constant 0 : i32
    return %c0_i32_0, %2 : i32, i32
  }
  func.func @transform_2(%arg0: i32, %arg1: i32) -> (i32, i32) {
    %c1_i32 = arith.constant 1 : i32
    %0 = arith.muli %arg0, %c1_i32 : i32
    %1 = arith.addi %0, %arg1 : i32
    %c0_i32 = arith.constant 0 : i32
    %2 = arith.minsi %1, %c0_i32 : i32
    %c0_i32_0 = arith.constant 0 : i32
    %c0_i32_1 = arith.constant 0 : i32
    return %c0_i32_0, %2 : i32, i32
  }
  func.func @transform_3(%arg0: i32, %arg1: i32) -> (i32, i32, i32) {
    %c0_i32 = arith.constant 0 : i32
    %c0_i32_0 = arith.constant 0 : i32
    %c0_i32_1 = arith.constant 0 : i32
    return %arg0, %c0_i32, %c0_i32_0 : i32, i32, i32
  }
}

</mosaic_0001>

<llo_original>
// kernel: tpu_custom_call.1
$region0: #{tpu_custom_call.1}
  #allocation0 [shape = 'u32[]', space=smem, size = 0x4, offset = 0x4, fixed_abs, tag = 'smem constant byte address 0x4 - core index']
  #allocation1 [shape = 'u32[144,128]{1,0:T(1,128)}', space=vmem, size = 0x12000, scoped, tag = 'internal scratch']
  #allocation2 [shape = 'f32[2,3]{1,0:T(2,128)}', space=vmem, size = 0x400, scoped, tag = 'scratch operand']
  #allocation3 [shape = 's32[2,128]{1,0:T(2,128)}', space=vmem, size = 0x400, scoped, tag = 'scratch operand']
  %s0 = inlined_call_operand.hbm [shape: f32[3,16], index: 0, kind: input, shape index: {}]
  %s1 = inlined_call_operand.vmem [shape: f32[1,16], index: 1, kind: input, shape index: {}]
  %s2 = inlined_call_operand.vmem [shape: s32[1,16], index: 2, kind: input, shape index: {}]
  %s3 = inlined_call_operand.hbm [shape: f32[1,2,3], index: 3, kind: output, shape index: {}]
  %s4 = sld [smem:[#allocation0]]
  $region42: #{tpu_custom_call.1} parent=0
    _
  %s6 = ssub.s32 1, %s4
  %s7 = scalar_select 0, %s6, %s4
  $region1: #{tpu_custom_call.1} parent=0
    #allocation4 [shape = 'u8[2048]{0}', space=vmem, size = 0x800, scoped, tag = 'input window, operand 0, single buffered']
    #allocation5 [shape = 's32[1]{0}', space=sflag, size = 0x4, scoped, tag = 'scoped memory for tpu_custom_call.1']
    #allocation6 [shape = 's32[1]{0}', space=sflag, size = 0x4, scoped, tag = 'scoped memory for tpu_custom_call.1']
    #allocation7 [shape = 'u8[1024]{0}', space=vmem, size = 0x400, scoped, tag = 'output window, operand 0, single buffered']
    %8 = vsyncpa [#allocation5], 0
    %9 = vsyncpa [#allocation6], 0
    // Predicated region
    $region2: #{tpu_custom_call.1} parent=1 // pred_check
      _
    $region3: #{tpu_custom_call.1} parent=1 // pred_check_branch
      %11 = sbr.rel (0) target = $region5
    $region4: #{tpu_custom_call.1} parent=1 // pred_region
      %s12 = sadd.s32 0, 0
      %p13 = scmp.lt.s32.totalorder %s12, 0
      %s14 = scalar_select %p13, %s12, 0
      %s16 = ssub.s32 64, 64
      %17 = vsyncadd [#allocation5], %s16
      %s18 = smul.addr %s14, 64
      %s19 = scalar_lea.hbm %s0, %s18
      %s21 = sshll.u32 [#allocation4], 4
      %s22 = int_to_ptr.vmem [resolvable:$true] %s21
      %24 = dma.hbm_to_vmem [thread:$0]  %s19, 64, %s22, [#allocation5]
    $region5: #{tpu_custom_call.1} parent=1 // pred_fallthru
      _
    // Predicated region
    $region6: #{tpu_custom_call.1} parent=1 // pred_check
      _
    $region7: #{tpu_custom_call.1} parent=1 // pred_check_branch
      %26 = sbr.rel (0) target = $region9
    $region8: #{tpu_custom_call.1} parent=1 // pred_region
      %s27 = sadd.s32 0, 0
      %p28 = scmp.lt.s32.totalorder %s27, 0
      %s29 = scalar_select %p28, %s27, 0
      %p30 = scmp.lt.s32.totalorder %s29, 0
      %s31 = scalar_select %p30, %s29, 0
      %s32 = scalar_lea.vmem %s1, %s31
      %s33 = sadd.s32 0, 0
      %p34 = scmp.lt.s32.totalorder %s33, 0
      %s35 = scalar_select %p34, %s33, 0
    $region9: #{tpu_custom_call.1} parent=1 // pred_fallthru
      _
    // Predicated region
    $region10: #{tpu_custom_call.1} parent=1 // pred_check
      _
    $region11: #{tpu_custom_call.1} parent=1 // pred_check_branch
      %37 = sbr.rel (0) target = $region13
    $region12: #{tpu_custom_call.1} parent=1 // pred_region
      %s38 = sadd.s32 0, 0
      %p39 = scmp.lt.s32.totalorder %s38, 0
      %s40 = scalar_select %p39, %s38, 0
      %p41 = scmp.lt.s32.totalorder %s40, 0
      %s42 = scalar_select %p41, %s40, 0
      %s43 = scalar_lea.vmem %s2, %s42
      %s44 = sadd.s32 0, 0
      %p45 = scmp.lt.s32.totalorder %s44, 0
      %s46 = scalar_select %p45, %s44, 0
    $region13: #{tpu_custom_call.1} parent=1 // pred_fallthru
      _
    // Predicated region
    $region14: #{tpu_custom_call.1} parent=1 // pred_check
      _
    $region15: #{tpu_custom_call.1} parent=1 // pred_check_branch
      %48 = sbr.rel (0) target = $region17
    $region16: #{tpu_custom_call.1} parent=1 // pred_region
      %49 = dma.done [#allocation5], 64
    $region17: #{tpu_custom_call.1} parent=1 // pred_fallthru
      _
    %s50 = sadd.s32 0, 0
    %p51 = scmp.lt.s32.totalorder %s50, 0
    %s52 = scalar_select %p51, %s50, 0
    %p53 = scmp.lt.s32.totalorder %s52, 0
    %s54 = scalar_select %p53, %s52, 0
    %s55 = scalar_lea.vmem %s1, %s54
    %s56 = sadd.s32 0, 0
    %p57 = scmp.lt.s32.totalorder %s56, 0
    %s58 = scalar_select %p57, %s56, 0
    %p59 = scmp.lt.s32.totalorder %s58, 0
    %s60 = scalar_select %p59, %s58, 0
    %s61 = scalar_lea.vmem %s2, %s60
    %s62 = sadd.s32 0, 0
    %p63 = scmp.lt.s32.totalorder %s62, 0
    %s64 = scalar_select %p63, %s62, 0
    %s65 = sadd.s32 0, 0
    %p66 = scmp.lt.s32.totalorder %s65, 0
    %s67 = scalar_select %p66, %s65, 0
    %p68 = scmp.lt.s32.totalorder %s67, 0
    %s69 = scalar_select %p68, %s67, 0
    %s70 = scalar_lea.vmem %s1, %s69
    %s71 = sadd.s32 0, 0
    %p72 = scmp.lt.s32.totalorder %s71, 0
    %s73 = scalar_select %p72, %s71, 0
    %s74 = sadd.s32 0, 0
    %p75 = scmp.lt.s32.totalorder %s74, 0
    %s76 = scalar_select %p75, %s74, 0
    %p77 = scmp.lt.s32.totalorder %s76, 0
    %s78 = scalar_select %p77, %s76, 0
    %s79 = scalar_lea.vmem %s2, %s78
    %s80 = sadd.s32 0, 0
    %p81 = scmp.lt.s32.totalorder %s80, 0
    %s82 = scalar_select %p81, %s80, 0
    %s83 = sadd.s32 0, 0
    %p84 = scmp.eq.s32.totalorder 0, 0
    // Predicated region
    $region18: #{tpu_custom_call.1} parent=1 // pred_check
      %p85 = pneg %p84
    $region19: #{tpu_custom_call.1} parent=1 // pred_check_branch
      %87 = sbr.rel (%p85) target = $region21
    $region20: #{tpu_custom_call.1} parent=1 // pred_region
      %vm88 = vcmask 17408
      %89 = vst.msk [vmem:[#allocation2] sm:$0x3] %vm88, 0.0
      %v90 = vlaneseq
      %v91 = vshrl.u32 %v90, 7
      %92 = vst [vmem:[#allocation3] sm:$0x3] %v91
    $region21: #{tpu_custom_call.1} parent=1 // pred_fallthru
      _
    %v93 = vld [vmem:[%s79] sm:$0x1]
    %v94 = vld [vmem:[%s70] sm:$0x1]
    %v95 = vld [vmem:[#allocation3] sm:$0x3]
    %v96 = vlaneseq
    %v97 = vshrl.u32 %v96, 7
    %v98 = vsub.s32 0, %v97
    %v99 = vrot.slane %v93, %v98
    %vm100 = vcmp.eq.s32.totalorder %v99, %v95
    %p101 = scmp.lt.s32.totalorder %s83, 0
    // Predicated region
    $region22: #{tpu_custom_call.1} parent=1 // pred_check
      %p102 = pneg %p101
    $region23: #{tpu_custom_call.1} parent=1 // pred_check_branch
      %104 = sbr.rel (%p102) target = $region25
    $region24: #{tpu_custom_call.1} parent=1 // pred_region
      %v106 = vlaneseq
      %v107 = vshrl.u32 %v106, 7
      %v108 = vsub.s32 0, %v107
      %v109 = vrot.slane %v94, %v108
      %v111 = vsel %vm100, %v109, 0.0
      %v112 = vld [vmem:[#allocation4] sm:$0x7]
      %v113 = vld [vmem:[#allocation2] sm:$0x3]
      %114 = vmatprep.subr.mxu0 0.0
      %v115 = vand.u32 %v112, 4294901760
      %116 = vmatpush1.xpose.msra.mxu0 %v115
      %117 = vmatprep.subr.mxu0 0.0
      %118 = vmatpush1.xpose.msra.mxu0 0.0
      %119 = vmatprep.subr.mxu0 0.0
      %120 = vmatpush1.xpose.msra.mxu0 0.0
      %121 = vmatprep.subr.mxu0 0.0
      %122 = vmatpush1.xpose.msra.mxu0 0.0
      %123 = vmatprep.subr.mxu0 0.0
      %124 = vmatpush1.xpose.msra.mxu0 0.0
      %125 = vmatprep.subr.mxu0 0.0
      %126 = vmatpush1.xpose.msra.mxu0 0.0
      %127 = vmatprep.subr.mxu0 0.0
      %128 = vmatpush1.xpose.msra.mxu0 0.0
      %129 = vmatprep.subr.mxu0 0.0
      %130 = vmatpush1.xpose.msra.mxu0 0.0
      %131 = vmatprep.subr.mxu0 0.0
      %132 = vmatpush1.xpose.msra.mxu0 0.0
      %133 = vmatprep.subr.mxu0 0.0
      %134 = vmatpush1.xpose.msra.mxu0 0.0
      %135 = vmatprep.subr.mxu0 0.0
      %136 = vmatpush1.xpose.msra.mxu0 0.0
      %137 = vmatprep.subr.mxu0 0.0
      %138 = vmatpush1.xpose.msra.mxu0 0.0
      %139 = vmatprep.subr.mxu0 0.0
      %140 = vmatpush1.xpose.msra.mxu0 0.0
      %141 = vmatprep.subr.mxu0 0.0
      %142 = vmatpush1.xpose.msra.mxu0 0.0
      %143 = vmatprep.subr.mxu0 0.0
      %144 = vmatpush1.xpose.msra.mxu0 0.0
      %145 = vmatprep.subr.mxu0 0.0
      %146 = vmatpush1.xpose.msra.mxu0 0.0
      %147 = vmatprep.subr.mxu0 0.0
      %148 = vmatpush1.xpose.msra.mxu0 0.0
      %149 = vmatprep.subr.mxu0 0.0
      %150 = vmatpush1.xpose.msra.mxu0 0.0
      %151 = vmatprep.subr.mxu0 0.0
      %152 = vmatpush1.xpose.msra.mxu0 0.0
      %153 = vmatprep.subr.mxu0 0.0
      %154 = vmatpush1.xpose.msra.mxu0 0.0
      %155 = vmatprep.subr.mxu0 0.0
      %156 = vmatpush1.xpose.msra.mxu0 0.0
      %157 = vmatprep.subr.mxu0 0.0
      %158 = vmatpush1.xpose.msra.mxu0 0.0
      %159 = vmatprep.subr.mxu0 0.0
      %160 = vmatpush1.xpose.msra.mxu0 0.0
      %161 = vmatprep.subr.mxu0 0.0
      %162 = vmatpush1.xpose.msra.mxu0 0.0
      %163 = vmatprep.subr.mxu0 0.0
      %164 = vmatpush1.xpose.msra.mxu0 0.0
      %165 = vmatprep.subr.mxu0 0.0
      %166 = vmatpush1.xpose.msra.mxu0 0.0
      %167 = vmatprep.subr.mxu0 0.0
      %168 = vmatpush1.xpose.msra.mxu0 0.0
      %169 = vmatprep.subr.mxu0 0.0
      %170 = vmatpush1.xpose.msra.mxu0 0.0
      %171 = vmatprep.subr.mxu0 0.0
      %172 = vmatpush1.xpose.msra.mxu0 0.0
      %173 = vmatprep.subr.mxu0 0.0
      %174 = vmatpush1.xpose.msra.mxu0 0.0
      %175 = vmatprep.subr.mxu0 0.0
      %176 = vmatpush1.xpose.msra.mxu0 0.0
      %177 = vmatprep.subr.mxu0 0.0
      %178 = vmatpush1.xpose.msra.mxu0 0.0
      %179 = vmatprep.mubr.f32.mxu0 0.0
      %v180 = vand.u32 %v111, 4294901760
      %v181 = vsub.f32 %v111, %v180
      %v182 = vand.u32 %v181, 4294901760
      %v183 = vsub.f32 %v181, %v182
      %v184 = vand.u32 %v183, 4294901760
      %185 = vmatmul.mubr.f32.gmra.mrb[0].mxu0 %v184
      %v186 = vpop.f32.mrb[0].mxu0
      %v187 = vadd.f32 0.0, %v186
      %v188 = vpop.f32.mrb[0].mxu0
      %189 = vdwg.mxu0
      %190 = vmatprep.subr.mxu0 0.0
      %v191 = vand.u32 %v112, 4294901760
      %v192 = vsub.f32 %v112, %v191
      %v193 = vand.u32 %v192, 4294901760
      %v194 = vsub.f32 %v192, %v193
      %v195 = vand.u32 %v194, 4294901760
      %196 = vmatpush1.xpose.msra.mxu0 %v195
      %197 = vmatprep.subr.mxu0 0.0
      %198 = vmatpush1.xpose.msra.mxu0 0.0
      %199 = vmatprep.subr.mxu0 0.0
      %200 = vmatpush1.xpose.msra.mxu0 0.0
      %201 = vmatprep.subr.mxu0 0.0
      %202 = vmatpush1.xpose.msra.mxu0 0.0
      %203 = vmatprep.subr.mxu0 0.0
      %204 = vmatpush1.xpose.msra.mxu0 0.0
      %205 = vmatprep.subr.mxu0 0.0
      %206 = vmatpush1.xpose.msra.mxu0 0.0
      %207 = vmatprep.subr.mxu0 0.0
      %208 = vmatpush1.xpose.msra.mxu0 0.0
      %209 = vmatprep.subr.mxu0 0.0
      %210 = vmatpush1.xpose.msra.mxu0 0.0
      %211 = vmatprep.subr.mxu0 0.0
      %212 = vmatpush1.xpose.msra.mxu0 0.0
      %213 = vmatprep.subr.mxu0 0.0
      %214 = vmatpush1.xpose.msra.mxu0 0.0
      %215 = vmatprep.subr.mxu0 0.0
      %216 = vmatpush1.xpose.msra.mxu0 0.0
      %217 = vmatprep.subr.mxu0 0.0
      %218 = vmatpush1.xpose.msra.mxu0 0.0
      %219 = vmatprep.subr.mxu0 0.0
      %220 = vmatpush1.xpose.msra.mxu0 0.0
      %221 = vmatprep.subr.mxu0 0.0
      %222 = vmatpush1.xpose.msra.mxu0 0.0
      %223 = vmatprep.subr.mxu0 0.0
      %224 = vmatpush1.xpose.msra.mxu0 0.0
      %225 = vmatprep.subr.mxu0 0.0
      %226 = vmatpush1.xpose.msra.mxu0 0.0
      %227 = vmatprep.subr.mxu0 0.0
      %228 = vmatpush1.xpose.msra.mxu0 0.0
      %229 = vmatprep.subr.mxu0 0.0
      %230 = vmatpush1.xpose.msra.mxu0 0.0
      %231 = vmatprep.subr.mxu0 0.0
      %232 = vmatpush1.xpose.msra.mxu0 0.0
      %233 = vmatprep.subr.mxu0 0.0
      %234 = vmatpush1.xpose.msra.mxu0 0.0
      %235 = vmatprep.subr.mxu0 0.0
      %236 = vmatpush1.xpose.msra.mxu0 0.0
      %237 = vmatprep.subr.mxu0 0.0
      %238 = vmatpush1.xpose.msra.mxu0 0.0
      %239 = vmatprep.subr.mxu0 0.0
      %240 = vmatpush1.xpose.msra.mxu0 0.0
      %241 = vmatprep.subr.mxu0 0.0
      %242 = vmatpush1.xpose.msra.mxu0 0.0
      %243 = vmatprep.subr.mxu0 0.0
      %244 = vmatpush1.xpose.msra.mxu0 0.0
      %245 = vmatprep.subr.mxu0 0.0
      %246 = vmatpush1.xpose.msra.mxu0 0.0
      %247 = vmatprep.subr.mxu0 0.0
      %248 = vmatpush1.xpose.msra.mxu0 0.0
      %249 = vmatprep.subr.mxu0 0.0
      %250 = vmatpush1.xpose.msra.mxu0 0.0
      %251 = vmatprep.subr.mxu0 0.0
      %252 = vmatpush1.xpose.msra.mxu0 0.0
      %253 = vmatprep.subr.mxu0 0.0
      %254 = vmatpush1.xpose.msra.mxu0 0.0
      %255 = vmatprep.subr.mxu0 0.0
      %256 = vmatpush1.xpose.msra.mxu0 0.0
      %257 = vmatprep.subr.mxu0 0.0
      %258 = vmatpush1.xpose.msra.mxu0 0.0
      %259 = vmatprep.mubr.f32.mxu0 0.0
      %v260 = vand.u32 %v111, 4294901760
      %261 = vmatmul.mubr.f32.gmra.mrb[0].mxu0 %v260
      %v262 = vpop.f32.mrb[0].mxu0
      %v263 = vadd.f32 %v187, %v262
      %v264 = vpop.f32.mrb[0].mxu0
      %265 = vdwg.mxu0
      %266 = vmatprep.subr.mxu0 0.0
      %v267 = vand.u32 %v112, 4294901760
      %v268 = vsub.f32 %v112, %v267
      %269 = vmatpush1.xpose.msra.mxu0 %v268
      %270 = vmatprep.subr.mxu0 0.0
      %271 = vmatpush1.xpose.msra.mxu0 0.0
      %272 = vmatprep.subr.mxu0 0.0
      %273 = vmatpush1.xpose.msra.mxu0 0.0
      %274 = vmatprep.subr.mxu0 0.0
      %275 = vmatpush1.xpose.msra.mxu0 0.0
      %276 = vmatprep.subr.mxu0 0.0
      %277 = vmatpush1.xpose.msra.mxu0 0.0
      %278 = vmatprep.subr.mxu0 0.0
      %279 = vmatpush1.xpose.msra.mxu0 0.0
      %280 = vmatprep.subr.mxu0 0.0
      %281 = vmatpush1.xpose.msra.mxu0 0.0
      %282 = vmatprep.subr.mxu0 0.0
      %283 = vmatpush1.xpose.msra.mxu0 0.0
      %284 = vmatprep.subr.mxu0 0.0
      %285 = vmatpush1.xpose.msra.mxu0 0.0
      %286 = vmatprep.subr.mxu0 0.0
      %287 = vmatpush1.xpose.msra.mxu0 0.0
      %288 = vmatprep.subr.mxu0 0.0
      %289 = vmatpush1.xpose.msra.mxu0 0.0
      %290 = vmatprep.subr.mxu0 0.0
      %291 = vmatpush1.xpose.msra.mxu0 0.0
      %292 = vmatprep.subr.mxu0 0.0
      %293 = vmatpush1.xpose.msra.mxu0 0.0
      %294 = vmatprep.subr.mxu0 0.0
      %295 = vmatpush1.xpose.msra.mxu0 0.0
      %296 = vmatprep.subr.mxu0 0.0
      %297 = vmatpush1.xpose.msra.mxu0 0.0
      %298 = vmatprep.subr.mxu0 0.0
      %299 = vmatpush1.xpose.msra.mxu0 0.0
      %300 = vmatprep.subr.mxu0 0.0
      %301 = vmatpush1.xpose.msra.mxu0 0.0
      %302 = vmatprep.subr.mxu0 0.0
      %303 = vmatpush1.xpose.msra.mxu0 0.0
      %304 = vmatprep.subr.mxu0 0.0
      %305 = vmatpush1.xpose.msra.mxu0 0.0
      %306 = vmatprep.subr.mxu0 0.0
      %307 = vmatpush1.xpose.msra.mxu0 0.0
      %308 = vmatprep.subr.mxu0 0.0
      %309 = vmatpush1.xpose.msra.mxu0 0.0
      %310 = vmatprep.subr.mxu0 0.0
      %311 = vmatpush1.xpose.msra.mxu0 0.0
      %312 = vmatprep.subr.mxu0 0.0
      %313 = vmatpush1.xpose.msra.mxu0 0.0
      %314 = vmatprep.subr.mxu0 0.0
      %315 = vmatpush1.xpose.msra.mxu0 0.0
      %316 = vmatprep.subr.mxu0 0.0
      %317 = vmatpush1.xpose.msra.mxu0 0.0
      %318 = vmatprep.subr.mxu0 0.0
      %319 = vmatpush1.xpose.msra.mxu0 0.0
      %320 = vmatprep.subr.mxu0 0.0
      %321 = vmatpush1.xpose.msra.mxu0 0.0
      %322 = vmatprep.subr.mxu0 0.0
      %323 = vmatpush1.xpose.msra.mxu0 0.0
      %324 = vmatprep.subr.mxu0 0.0
      %325 = vmatpush1.xpose.msra.mxu0 0.0
      %326 = vmatprep.subr.mxu0 0.0
      %327 = vmatpush1.xpose.msra.mxu0 0.0
      %328 = vmatprep.subr.mxu0 0.0
      %329 = vmatpush1.xpose.msra.mxu0 0.0
      %330 = vmatprep.subr.mxu0 0.0
      %331 = vmatpush1.xpose.msra.mxu0 0.0
      %332 = vmatprep.mubr.f32.mxu0 0.0
      %v333 = vand.u32 %v111, 4294901760
      %v334 = vsub.f32 %v111, %v333
      %335 = vmatmul.mubr.f32.gmra.mrb[0].mxu0 %v334
      %v336 = vpop.f32.mrb[0].mxu0
      %v337 = vadd.f32 %v263, %v336
      %v338 = vpop.f32.mrb[0].mxu0
      %339 = vdwg.mxu0
      %340 = vmatprep.subr.mxu0 0.0
      %v341 = vand.u32 %v112, 4294901760
      %342 = vmatpush1.xpose.msra.mxu0 %v341
      %343 = vmatprep.subr.mxu0 0.0
      %344 = vmatpush1.xpose.msra.mxu0 0.0
      %345 = vmatprep.subr.mxu0 0.0
      %346 = vmatpush1.xpose.msra.mxu0 0.0
      %347 = vmatprep.subr.mxu0 0.0
      %348 = vmatpush1.xpose.msra.mxu0 0.0
      %349 = vmatprep.subr.mxu0 0.0
      %350 = vmatpush1.xpose.msra.mxu0 0.0
      %351 = vmatprep.subr.mxu0 0.0
      %352 = vmatpush1.xpose.msra.mxu0 0.0
      %353 = vmatprep.subr.mxu0 0.0
      %354 = vmatpush1.xpose.msra.mxu0 0.0
      %355 = vmatprep.subr.mxu0 0.0
      %356 = vmatpush1.xpose.msra.mxu0 0.0
      %357 = vmatprep.subr.mxu0 0.0
      %358 = vmatpush1.xpose.msra.mxu0 0.0
      %359 = vmatprep.subr.mxu0 0.0
      %360 = vmatpush1.xpose.msra.mxu0 0.0
      %361 = vmatprep.subr.mxu0 0.0
      %362 = vmatpush1.xpose.msra.mxu0 0.0
      %363 = vmatprep.subr.mxu0 0.0
      %364 = vmatpush1.xpose.msra.mxu0 0.0
      %365 = vmatprep.subr.mxu0 0.0
      %366 = vmatpush1.xpose.msra.mxu0 0.0
      %367 = vmatprep.subr.mxu0 0.0
      %368 = vmatpush1.xpose.msra.mxu0 0.0
      %369 = vmatprep.subr.mxu0 0.0
      %370 = vmatpush1.xpose.msra.mxu0 0.0
      %371 = vmatprep.subr.mxu0 0.0
      %372 = vmatpush1.xpose.msra.mxu0 0.0
      %373 = vmatprep.subr.mxu0 0.0
      %374 = vmatpush1.xpose.msra.mxu0 0.0
      %375 = vmatprep.subr.mxu0 0.0
      %376 = vmatpush1.xpose.msra.mxu0 0.0
      %377 = vmatprep.subr.mxu0 0.0
      %378 = vmatpush1.xpose.msra.mxu0 0.0
      %379 = vmatprep.subr.mxu0 0.0
      %380 = vmatpush1.xpose.msra.mxu0 0.0
      %381 = vmatprep.subr.mxu0 0.0
      %382 = vmatpush1.xpose.msra.mxu0 0.0
      %383 = vmatprep.subr.mxu0 0.0
      %384 = vmatpush1.xpose.msra.mxu0 0.0
      %385 = vmatprep.subr.mxu0 0.0
      %386 = vmatpush1.xpose.msra.mxu0 0.0
      %387 = vmatprep.subr.mxu0 0.0
      %388 = vmatpush1.xpose.msra.mxu0 0.0
      %389 = vmatprep.subr.mxu0 0.0
      %390 = vmatpush1.xpose.msra.mxu0 0.0
      %391 = vmatprep.subr.mxu0 0.0
      %392 = vmatpush1.xpose.msra.mxu0 0.0
      %393 = vmatprep.subr.mxu0 0.0
      %394 = vmatpush1.xpose.msra.mxu0 0.0
      %395 = vmatprep.subr.mxu0 0.0
      %396 = vmatpush1.xpose.msra.mxu0 0.0
      %397 = vmatprep.subr.mxu0 0.0
      %398 = vmatpush1.xpose.msra.mxu0 0.0
      %399 = vmatprep.subr.mxu0 0.0
      %400 = vmatpush1.xpose.msra.mxu0 0.0
      %401 = vmatprep.subr.mxu0 0.0
      %402 = vmatpush1.xpose.msra.mxu0 0.0
      %403 = vmatprep.subr.mxu0 0.0
      %404 = vmatpush1.xpose.msra.mxu0 0.0
      %405 = vmatprep.mubr.f32.mxu0 0.0
      %v406 = vand.u32 %v111, 4294901760
      %v407 = vsub.f32 %v111, %v406
      %v408 = vand.u32 %v407, 4294901760
      %409 = vmatmul.mubr.f32.gmra.mrb[0].mxu0 %v408
      %v410 = vpop.f32.mrb[0].mxu0
      %v411 = vadd.f32 %v337, %v410
      %v412 = vpop.f32.mrb[0].mxu0
      %413 = vdwg.mxu0
      %414 = vmatprep.subr.mxu0 0.0
      %v415 = vand.u32 %v112, 4294901760
      %v416 = vsub.f32 %v112, %v415
      %v417 = vand.u32 %v416, 4294901760
      %418 = vmatpush1.xpose.msra.mxu0 %v417
      %419 = vmatprep.subr.mxu0 0.0
      %420 = vmatpush1.xpose.msra.mxu0 0.0
      %421 = vmatprep.subr.mxu0 0.0
      %422 = vmatpush1.xpose.msra.mxu0 0.0
      %423 = vmatprep.subr.mxu0 0.0
      %424 = vmatpush1.xpose.msra.mxu0 0.0
      %425 = vmatprep.subr.mxu0 0.0
      %426 = vmatpush1.xpose.msra.mxu0 0.0
      %427 = vmatprep.subr.mxu0 0.0
      %428 = vmatpush1.xpose.msra.mxu0 0.0
      %429 = vmatprep.subr.mxu0 0.0
      %430 = vmatpush1.xpose.msra.mxu0 0.0
      %431 = vmatprep.subr.mxu0 0.0
      %432 = vmatpush1.xpose.msra.mxu0 0.0
      %433 = vmatprep.subr.mxu0 0.0
      %434 = vmatpush1.xpose.msra.mxu0 0.0
      %435 = vmatprep.subr.mxu0 0.0
      %436 = vmatpush1.xpose.msra.mxu0 0.0
      %437 = vmatprep.subr.mxu0 0.0
      %438 = vmatpush1.xpose.msra.mxu0 0.0
      %439 = vmatprep.subr.mxu0 0.0
      %440 = vmatpush1.xpose.msra.mxu0 0.0
      %441 = vmatprep.subr.mxu0 0.0
      %442 = vmatpush1.xpose.msra.mxu0 0.0
      %443 = vmatprep.subr.mxu0 0.0
      %444 = vmatpush1.xpose.msra.mxu0 0.0
      %445 = vmatprep.subr.mxu0 0.0
      %446 = vmatpush1.xpose.msra.mxu0 0.0
      %447 = vmatprep.subr.mxu0 0.0
      %448 = vmatpush1.xpose.msra.mxu0 0.0
      %449 = vmatprep.subr.mxu0 0.0
      %450 = vmatpush1.xpose.msra.mxu0 0.0
      %451 = vmatprep.subr.mxu0 0.0
      %452 = vmatpush1.xpose.msra.mxu0 0.0
      %453 = vmatprep.subr.mxu0 0.0
      %454 = vmatpush1.xpose.msra.mxu0 0.0
      %455 = vmatprep.subr.mxu0 0.0
      %456 = vmatpush1.xpose.msra.mxu0 0.0
      %457 = vmatprep.subr.mxu0 0.0
      %458 = vmatpush1.xpose.msra.mxu0 0.0
      %459 = vmatprep.subr.mxu0 0.0
      %460 = vmatpush1.xpose.msra.mxu0 0.0
      %461 = vmatprep.subr.mxu0 0.0
      %462 = vmatpush1.xpose.msra.mxu0 0.0
      %463 = vmatprep.subr.mxu0 0.0
      %464 = vmatpush1.xpose.msra.mxu0 0.0
      %465 = vmatprep.subr.mxu0 0.0
      %466 = vmatpush1.xpose.msra.mxu0 0.0
      %467 = vmatprep.subr.mxu0 0.0
      %468 = vmatpush1.xpose.msra.mxu0 0.0
      %469 = vmatprep.subr.mxu0 0.0
      %470 = vmatpush1.xpose.msra.mxu0 0.0
      %471 = vmatprep.subr.mxu0 0.0
      %472 = vmatpush1.xpose.msra.mxu0 0.0
      %473 = vmatprep.subr.mxu0 0.0
      %474 = vmatpush1.xpose.msra.mxu0 0.0
      %475 = vmatprep.subr.mxu0 0.0
      %476 = vmatpush1.xpose.msra.mxu0 0.0
      %477 = vmatprep.subr.mxu0 0.0
      %478 = vmatpush1.xpose.msra.mxu0 0.0
      %479 = vmatprep.subr.mxu0 0.0
      %480 = vmatpush1.xpose.msra.mxu0 0.0
      %481 = vmatprep.mubr.f32.mxu0 0.0
      %v482 = vand.u32 %v111, 4294901760
      %483 = vmatmul.mubr.f32.gmra.mrb[0].mxu0 %v482
      %v484 = vpop.f32.mrb[0].mxu0
      %v485 = vadd.f32 %v411, %v484
      %v486 = vpop.f32.mrb[0].mxu0
      %487 = vdwg.mxu0
      %488 = vmatprep.subr.mxu0 0.0
      %v489 = vand.u32 %v112, 4294901760
      %490 = vmatpush1.xpose.msra.mxu0 %v489
      %491 = vmatprep.subr.mxu0 0.0
      %492 = vmatpush1.xpose.msra.mxu0 0.0
      %493 = vmatprep.subr.mxu0 0.0
      %494 = vmatpush1.xpose.msra.mxu0 0.0
      %495 = vmatprep.subr.mxu0 0.0
      %496 = vmatpush1.xpose.msra.mxu0 0.0
      %497 = vmatprep.subr.mxu0 0.0
      %498 = vmatpush1.xpose.msra.mxu0 0.0
      %499 = vmatprep.subr.mxu0 0.0
      %500 = vmatpush1.xpose.msra.mxu0 0.0
      %501 = vmatprep.subr.mxu0 0.0
      %502 = vmatpush1.xpose.msra.mxu0 0.0
      %503 = vmatprep.subr.mxu0 0.0
      %504 = vmatpush1.xpose.msra.mxu0 0.0
      %505 = vmatprep.subr.mxu0 0.0
      %506 = vmatpush1.xpose.msra.mxu0 0.0
      %507 = vmatprep.subr.mxu0 0.0
      %508 = vmatpush1.xpose.msra.mxu0 0.0
      %509 = vmatprep.subr.mxu0 0.0
      %510 = vmatpush1.xpose.msra.mxu0 0.0
      %511 = vmatprep.subr.mxu0 0.0
      %512 = vmatpush1.xpose.msra.mxu0 0.0
      %513 = vmatprep.subr.mxu0 0.0
      %514 = vmatpush1.xpose.msra.mxu0 0.0
      %515 = vmatprep.subr.mxu0 0.0
      %516 = vmatpush1.xpose.msra.mxu0 0.0
      %517 = vmatprep.subr.mxu0 0.0
      %518 = vmatpush1.xpose.msra.mxu0 0.0
      %519 = vmatprep.subr.mxu0 0.0
      %520 = vmatpush1.xpose.msra.mxu0 0.0
      %521 = vmatprep.subr.mxu0 0.0
      %522 = vmatpush1.xpose.msra.mxu0 0.0
      %523 = vmatprep.subr.mxu0 0.0
      %524 = vmatpush1.xpose.msra.mxu0 0.0
      %525 = vmatprep.subr.mxu0 0.0
      %526 = vmatpush1.xpose.msra.mxu0 0.0
      %527 = vmatprep.subr.mxu0 0.0
      %528 = vmatpush1.xpose.msra.mxu0 0.0
      %529 = vmatprep.subr.mxu0 0.0
      %530 = vmatpush1.xpose.msra.mxu0 0.0
      %531 = vmatprep.subr.mxu0 0.0
      %532 = vmatpush1.xpose.msra.mxu0 0.0
      %533 = vmatprep.subr.mxu0 0.0
      %534 = vmatpush1.xpose.msra.mxu0 0.0
      %535 = vmatprep.subr.mxu0 0.0
      %536 = vmatpush1.xpose.msra.mxu0 0.0
      %537 = vmatprep.subr.mxu0 0.0
      %538 = vmatpush1.xpose.msra.mxu0 0.0
      %539 = vmatprep.subr.mxu0 0.0
      %540 = vmatpush1.xpose.msra.mxu0 0.0
      %541 = vmatprep.subr.mxu0 0.0
      %542 = vmatpush1.xpose.msra.mxu0 0.0
      %543 = vmatprep.subr.mxu0 0.0
      %544 = vmatpush1.xpose.msra.mxu0 0.0
      %545 = vmatprep.subr.mxu0 0.0
      %546 = vmatpush1.xpose.msra.mxu0 0.0
      %547 = vmatprep.subr.mxu0 0.0
      %548 = vmatpush1.xpose.msra.mxu0 0.0
      %549 = vmatprep.subr.mxu0 0.0
      %550 = vmatpush1.xpose.msra.mxu0 0.0
      %551 = vmatprep.subr.mxu0 0.0
      %552 = vmatpush1.xpose.msra.mxu0 0.0
      %553 = vmatprep.mubr.f32.mxu0 0.0
      %v554 = vand.u32 %v111, 4294901760
      %555 = vmatmul.mubr.f32.gmra.mrb[0].mxu0 %v554
      %v556 = vpop.f32.mrb[0].mxu0
      %v557 = vadd.f32 %v485, %v556
      %v558 = vpop.f32.mrb[0].mxu0
      %559 = vdwg.mxu0
      %v560 = vadd.f32 %v113, %v557
      %vm561 = vcmask 17408
      %562 = vst.msk [vmem:[#allocation2] sm:$0x3] %vm561, %v560
    $region25: #{tpu_custom_call.1} parent=1 // pred_fallthru
      _
    %p563 = scmp.ge.s32.totalorder %s83, 0
    // Predicated region
    $region26: #{tpu_custom_call.1} parent=1 // pred_check
      %p564 = pneg %p563
    $region27: #{tpu_custom_call.1} parent=1 // pred_check_branch
      %566 = sbr.rel (%p564) target = $region29
    $region28: #{tpu_custom_call.1} parent=1 // pred_region
      %v567 = vlaneseq
      %v568 = vand.u32 %v567, 127
      %s569 = smul.u32 %s83, 128
      %v570 = vstv %s569
      %v571 = vadd.s32 %v570, %v568
      %vm572 = vcmp.lt.s32.totalorder %v571, 16
      %v573 = vsel %vm572, %v94, 0.0
      %v574 = vlaneseq
      %v575 = vshrl.u32 %v574, 7
      %v576 = vsub.s32 0, %v575
      %v577 = vrot.slane %v573, %v576
      %v578 = vsel %vm100, %v577, 0.0
      %v579 = vld [vmem:[#allocation4] sm:$0x7]
      %v580 = vsel %vm572, 1, 0
      %vm581 = vcmp.eq.s32.totalorder %v580, 1
      %v582 = vsel %vm581, %v579, 0.0
      %v583 = vld [vmem:[#allocation2] sm:$0x3]
      %584 = vmatprep.subr.mxu0 0.0
      %v585 = vand.u32 %v582, 4294901760
      %586 = vmatpush1.xpose.msra.mxu0 %v585
      %587 = vmatprep.subr.mxu0 0.0
      %588 = vmatpush1.xpose.msra.mxu0 0.0
      %589 = vmatprep.subr.mxu0 0.0
      %590 = vmatpush1.xpose.msra.mxu0 0.0
      %591 = vmatprep.subr.mxu0 0.0
      %592 = vmatpush1.xpose.msra.mxu0 0.0
      %593 = vmatprep.subr.mxu0 0.0
      %594 = vmatpush1.xpose.msra.mxu0 0.0
      %595 = vmatprep.subr.mxu0 0.0
      %596 = vmatpush1.xpose.msra.mxu0 0.0
      %597 = vmatprep.subr.mxu0 0.0
      %598 = vmatpush1.xpose.msra.mxu0 0.0
      %599 = vmatprep.subr.mxu0 0.0
      %600 = vmatpush1.xpose.msra.mxu0 0.0
      %601 = vmatprep.subr.mxu0 0.0
      %602 = vmatpush1.xpose.msra.mxu0 0.0
      %603 = vmatprep.subr.mxu0 0.0
      %604 = vmatpush1.xpose.msra.mxu0 0.0
      %605 = vmatprep.subr.mxu0 0.0
      %606 = vmatpush1.xpose.msra.mxu0 0.0
      %607 = vmatprep.subr.mxu0 0.0
      %608 = vmatpush1.xpose.msra.mxu0 0.0
      %609 = vmatprep.subr.mxu0 0.0
      %610 = vmatpush1.xpose.msra.mxu0 0.0
      %611 = vmatprep.subr.mxu0 0.0
      %612 = vmatpush1.xpose.msra.mxu0 0.0
      %613 = vmatprep.subr.mxu0 0.0
      %614 = vmatpush1.xpose.msra.mxu0 0.0
      %615 = vmatprep.subr.mxu0 0.0
      %616 = vmatpush1.xpose.msra.mxu0 0.0
      %617 = vmatprep.subr.mxu0 0.0
      %618 = vmatpush1.xpose.msra.mxu0 0.0
      %619 = vmatprep.subr.mxu0 0.0
      %620 = vmatpush1.xpose.msra.mxu0 0.0
      %621 = vmatprep.subr.mxu0 0.0
      %622 = vmatpush1.xpose.msra.mxu0 0.0
      %623 = vmatprep.subr.mxu0 0.0
      %624 = vmatpush1.xpose.msra.mxu0 0.0
      %625 = vmatprep.subr.mxu0 0.0
      %626 = vmatpush1.xpose.msra.mxu0 0.0
      %627 = vmatprep.subr.mxu0 0.0
      %628 = vmatpush1.xpose.msra.mxu0 0.0
      %629 = vmatprep.subr.mxu0 0.0
      %630 = vmatpush1.xpose.msra.mxu0 0.0
      %631 = vmatprep.subr.mxu0 0.0
      %632 = vmatpush1.xpose.msra.mxu0 0.0
      %633 = vmatprep.subr.mxu0 0.0
      %634 = vmatpush1.xpose.msra.mxu0 0.0
      %635 = vmatprep.subr.mxu0 0.0
      %636 = vmatpush1.xpose.msra.mxu0 0.0
      %637 = vmatprep.subr.mxu0 0.0
      %638 = vmatpush1.xpose.msra.mxu0 0.0
      %639 = vmatprep.subr.mxu0 0.0
      %640 = vmatpush1.xpose.msra.mxu0 0.0
      %641 = vmatprep.subr.mxu0 0.0
      %642 = vmatpush1.xpose.msra.mxu0 0.0
      %643 = vmatprep.subr.mxu0 0.0
      %644 = vmatpush1.xpose.msra.mxu0 0.0
      %645 = vmatprep.subr.mxu0 0.0
      %646 = vmatpush1.xpose.msra.mxu0 0.0
      %647 = vmatprep.subr.mxu0 0.0
      %648 = vmatpush1.xpose.msra.mxu0 0.0
      %649 = vmatprep.mubr.f32.mxu0 0.0
      %v650 = vand.u32 %v578, 4294901760
      %v651 = vsub.f32 %v578, %v650
      %v652 = vand.u32 %v651, 4294901760
      %v653 = vsub.f32 %v651, %v652
      %v654 = vand.u32 %v653, 4294901760
      %655 = vmatmul.mubr.f32.gmra.mrb[0].mxu0 %v654
      %v656 = vpop.f32.mrb[0].mxu0
      %v657 = vadd.f32 0.0, %v656
      %v658 = vpop.f32.mrb[0].mxu0
      %659 = vdwg.mxu0
      %660 = vmatprep.subr.mxu0 0.0
      %v661 = vand.u32 %v582, 4294901760
      %v662 = vsub.f32 %v582, %v661
      %v663 = vand.u32 %v662, 4294901760
      %v664 = vsub.f32 %v662, %v663
      %v665 = vand.u32 %v664, 4294901760
      %666 = vmatpush1.xpose.msra.mxu0 %v665
      %667 = vmatprep.subr.mxu0 0.0
      %668 = vmatpush1.xpose.msra.mxu0 0.0
      %669 = vmatprep.subr.mxu0 0.0
      %670 = vmatpush1.xpose.msra.mxu0 0.0
      %671 = vmatprep.subr.mxu0 0.0
      %672 = vmatpush1.xpose.msra.mxu0 0.0
      %673 = vmatprep.subr.mxu0 0.0
      %674 = vmatpush1.xpose.msra.mxu0 0.0
      %675 = vmatprep.subr.mxu0 0.0
      %676 = vmatpush1.xpose.msra.mxu0 0.0
      %677 = vmatprep.subr.mxu0 0.0
      %678 = vmatpush1.xpose.msra.mxu0 0.0
      %679 = vmatprep.subr.mxu0 0.0
      %680 = vmatpush1.xpose.msra.mxu0 0.0
      %681 = vmatprep.subr.mxu0 0.0
      %682 = vmatpush1.xpose.msra.mxu0 0.0
      %683 = vmatprep.subr.mxu0 0.0
      %684 = vmatpush1.xpose.msra.mxu0 0.0
      %685 = vmatprep.subr.mxu0 0.0
      %686 = vmatpush1.xpose.msra.mxu0 0.0
      %687 = vmatprep.subr.mxu0 0.0
      %688 = vmatpush1.xpose.msra.mxu0 0.0
      %689 = vmatprep.subr.mxu0 0.0
      %690 = vmatpush1.xpose.msra.mxu0 0.0
      %691 = vmatprep.subr.mxu0 0.0
      %692 = vmatpush1.xpose.msra.mxu0 0.0
      %693 = vmatprep.subr.mxu0 0.0
      %694 = vmatpush1.xpose.msra.mxu0 0.0
      %695 = vmatprep.subr.mxu0 0.0
      %696 = vmatpush1.xpose.msra.mxu0 0.0
      %697 = vmatprep.subr.mxu0 0.0
      %698 = vmatpush1.xpose.msra.mxu0 0.0
      %699 = vmatprep.subr.mxu0 0.0
      %700 = vmatpush1.xpose.msra.mxu0 0.0
      %701 = vmatprep.subr.mxu0 0.0
      %702 = vmatpush1.xpose.msra.mxu0 0.0
      %703 = vmatprep.subr.mxu0 0.0
      %704 = vmatpush1.xpose.msra.mxu0 0.0
      %705 = vmatprep.subr.mxu0 0.0
      %706 = vmatpush1.xpose.msra.mxu0 0.0
      %707 = vmatprep.subr.mxu0 0.0
      %708 = vmatpush1.xpose.msra.mxu0 0.0
      %709 = vmatprep.subr.mxu0 0.0
      %710 = vmatpush1.xpose.msra.mxu0 0.0
      %711 = vmatprep.subr.mxu0 0.0
      %712 = vmatpush1.xpose.msra.mxu0 0.0
      %713 = vmatprep.subr.mxu0 0.0
      %714 = vmatpush1.xpose.msra.mxu0 0.0
      %715 = vmatprep.subr.mxu0 0.0
      %716 = vmatpush1.xpose.msra.mxu0 0.0
      %717 = vmatprep.subr.mxu0 0.0
      %718 = vmatpush1.xpose.msra.mxu0 0.0
      %719 = vmatprep.subr.mxu0 0.0
      %720 = vmatpush1.xpose.msra.mxu0 0.0
      %721 = vmatprep.subr.mxu0 0.0
      %722 = vmatpush1.xpose.msra.mxu0 0.0
      %723 = vmatprep.subr.mxu0 0.0
      %724 = vmatpush1.xpose.msra.mxu0 0.0
      %725 = vmatprep.subr.mxu0 0.0
      %726 = vmatpush1.xpose.msra.mxu0 0.0
      %727 = vmatprep.subr.mxu0 0.0
      %728 = vmatpush1.xpose.msra.mxu0 0.0
      %729 = vmatprep.mubr.f32.mxu0 0.0
      %v730 = vand.u32 %v578, 4294901760
      %731 = vmatmul.mubr.f32.gmra.mrb[0].mxu0 %v730
      %v732 = vpop.f32.mrb[0].mxu0
      %v733 = vadd.f32 %v657, %v732
      %v734 = vpop.f32.mrb[0].mxu0
      %735 = vdwg.mxu0
      %736 = vmatprep.subr.mxu0 0.0
      %v737 = vand.u32 %v582, 4294901760
      %v738 = vsub.f32 %v582, %v737
      %739 = vmatpush1.xpose.msra.mxu0 %v738
      %740 = vmatprep.subr.mxu0 0.0
      %741 = vmatpush1.xpose.msra.mxu0 0.0
      %742 = vmatprep.subr.mxu0 0.0
      %743 = vmatpush1.xpose.msra.mxu0 0.0
      %744 = vmatprep.subr.mxu0 0.0
      %745 = vmatpush1.xpose.msra.mxu0 0.0
      %746 = vmatprep.subr.mxu0 0.0
      %747 = vmatpush1.xpose.msra.mxu0 0.0
      %748 = vmatprep.subr.mxu0 0.0
      %749 = vmatpush1.xpose.msra.mxu0 0.0
      %750 = vmatprep.subr.mxu0 0.0
      %751 = vmatpush1.xpose.msra.mxu0 0.0
      %752 = vmatprep.subr.mxu0 0.0
      %753 = vmatpush1.xpose.msra.mxu0 0.0
      %754 = vmatprep.subr.mxu0 0.0
      %755 = vmatpush1.xpose.msra.mxu0 0.0
      %756 = vmatprep.subr.mxu0 0.0
      %757 = vmatpush1.xpose.msra.mxu0 0.0
      %758 = vmatprep.subr.mxu0 0.0
      %759 = vmatpush1.xpose.msra.mxu0 0.0
      %760 = vmatprep.subr.mxu0 0.0
      %761 = vmatpush1.xpose.msra.mxu0 0.0
      %762 = vmatprep.subr.mxu0 0.0
      %763 = vmatpush1.xpose.msra.mxu0 0.0
      %764 = vmatprep.subr.mxu0 0.0
      %765 = vmatpush1.xpose.msra.mxu0 0.0
      %766 = vmatprep.subr.mxu0 0.0
      %767 = vmatpush1.xpose.msra.mxu0 0.0
      %768 = vmatprep.subr.mxu0 0.0
      %769 = vmatpush1.xpose.msra.mxu0 0.0
      %770 = vmatprep.subr.mxu0 0.0
      %771 = vmatpush1.xpose.msra.mxu0 0.0
      %772 = vmatprep.subr.mxu0 0.0
      %773 = vmatpush1.xpose.msra.mxu0 0.0
      %774 = vmatprep.subr.mxu0 0.0
      %775 = vmatpush1.xpose.msra.mxu0 0.0
      %776 = vmatprep.subr.mxu0 0.0
      %777 = vmatpush1.xpose.msra.mxu0 0.0
      %778 = vmatprep.subr.mxu0 0.0
      %779 = vmatpush1.xpose.msra.mxu0 0.0
      %780 = vmatprep.subr.mxu0 0.0
      %781 = vmatpush1.xpose.msra.mxu0 0.0
      %782 = vmatprep.subr.mxu0 0.0
      %783 = vmatpush1.xpose.msra.mxu0 0.0
      %784 = vmatprep.subr.mxu0 0.0
      %785 = vmatpush1.xpose.msra.mxu0 0.0
      %786 = vmatprep.subr.mxu0 0.0
      %787 = vmatpush1.xpose.msra.mxu0 0.0
      %788 = vmatprep.subr.mxu0 0.0
      %789 = vmatpush1.xpose.msra.mxu0 0.0
      %790 = vmatprep.subr.mxu0 0.0
      %791 = vmatpush1.xpose.msra.mxu0 0.0
      %792 = vmatprep.subr.mxu0 0.0
      %793 = vmatpush1.xpose.msra.mxu0 0.0
      %794 = vmatprep.subr.mxu0 0.0
      %795 = vmatpush1.xpose.msra.mxu0 0.0
      %796 = vmatprep.subr.mxu0 0.0
      %797 = vmatpush1.xpose.msra.mxu0 0.0
      %798 = vmatprep.subr.mxu0 0.0
      %799 = vmatpush1.xpose.msra.mxu0 0.0
      %800 = vmatprep.subr.mxu0 0.0
      %801 = vmatpush1.xpose.msra.mxu0 0.0
      %802 = vmatprep.mubr.f32.mxu0 0.0
      %v803 = vand.u32 %v578, 4294901760
      %v804 = vsub.f32 %v578, %v803
      %805 = vmatmul.mubr.f32.gmra.mrb[0].mxu0 %v804
      %v806 = vpop.f32.mrb[0].mxu0
      %v807 = vadd.f32 %v733, %v806
      %v808 = vpop.f32.mrb[0].mxu0
      %809 = vdwg.mxu0
      %810 = vmatprep.subr.mxu0 0.0
      %v811 = vand.u32 %v582, 4294901760
      %812 = vmatpush1.xpose.msra.mxu0 %v811
      %813 = vmatprep.subr.mxu0 0.0
      %814 = vmatpush1.xpose.msra.mxu0 0.0
      %815 = vmatprep.subr.mxu0 0.0
      %816 = vmatpush1.xpose.msra.mxu0 0.0
      %817 = vmatprep.subr.mxu0 0.0
      %818 = vmatpush1.xpose.msra.mxu0 0.0
      %819 = vmatprep.subr.mxu0 0.0
      %820 = vmatpush1.xpose.msra.mxu0 0.0
      %821 = vmatprep.subr.mxu0 0.0
      %822 = vmatpush1.xpose.msra.mxu0 0.0
      %823 = vmatprep.subr.mxu0 0.0
      %824 = vmatpush1.xpose.msra.mxu0 0.0
      %825 = vmatprep.subr.mxu0 0.0
      %826 = vmatpush1.xpose.msra.mxu0 0.0
      %827 = vmatprep.subr.mxu0 0.0
      %828 = vmatpush1.xpose.msra.mxu0 0.0
      %829 = vmatprep.subr.mxu0 0.0
      %830 = vmatpush1.xpose.msra.mxu0 0.0
      %831 = vmatprep.subr.mxu0 0.0
      %832 = vmatpush1.xpose.msra.mxu0 0.0
      %833 = vmatprep.subr.mxu0 0.0
      %834 = vmatpush1.xpose.msra.mxu0 0.0
      %835 = vmatprep.subr.mxu0 0.0
      %836 = vmatpush1.xpose.msra.mxu0 0.0
      %837 = vmatprep.subr.mxu0 0.0
      %838 = vmatpush1.xpose.msra.mxu0 0.0
      %839 = vmatprep.subr.mxu0 0.0
      %840 = vmatpush1.xpose.msra.mxu0 0.0
      %841 = vmatprep.subr.mxu0 0.0
      %842 = vmatpush1.xpose.msra.mxu0 0.0
      %843 = vmatprep.subr.mxu0 0.0
      %844 = vmatpush1.xpose.msra.mxu0 0.0
      %845 = vmatprep.subr.mxu0 0.0
      %846 = vmatpush1.xpose.msra.mxu0 0.0
      %847 = vmatprep.subr.mxu0 0.0
      %848 = vmatpush1.xpose.msra.mxu0 0.0
      %849 = vmatprep.subr.mxu0 0.0
      %850 = vmatpush1.xpose.msra.mxu0 0.0
      %851 = vmatprep.subr.mxu0 0.0
      %852 = vmatpush1.xpose.msra.mxu0 0.0
      %853 = vmatprep.subr.mxu0 0.0
      %854 = vmatpush1.xpose.msra.mxu0 0.0
      %855 = vmatprep.subr.mxu0 0.0
      %856 = vmatpush1.xpose.msra.mxu0 0.0
      %857 = vmatprep.subr.mxu0 0.0
      %858 = vmatpush1.xpose.msra.mxu0 0.0
      %859 = vmatprep.subr.mxu0 0.0
      %860 = vmatpush1.xpose.msra.mxu0 0.0
      %861 = vmatprep.subr.mxu0 0.0
      %862 = vmatpush1.xpose.msra.mxu0 0.0
      %863 = vmatprep.subr.mxu0 0.0
      %864 = vmatpush1.xpose.msra.mxu0 0.0
      %865 = vmatprep.subr.mxu0 0.0
      %866 = vmatpush1.xpose.msra.mxu0 0.0
      %867 = vmatprep.subr.mxu0 0.0
      %868 = vmatpush1.xpose.msra.mxu0 0.0
      %869 = vmatprep.subr.mxu0 0.0
      %870 = vmatpush1.xpose.msra.mxu0 0.0
      %871 = vmatprep.subr.mxu0 0.0
      %872 = vmatpush1.xpose.msra.mxu0 0.0
      %873 = vmatprep.subr.mxu0 0.0
      %874 = vmatpush1.xpose.msra.mxu0 0.0
      %875 = vmatprep.mubr.f32.mxu0 0.0
      %v876 = vand.u32 %v578, 4294901760
      %v877 = vsub.f32 %v578, %v876
      %v878 = vand.u32 %v877, 4294901760
      %879 = vmatmul.mubr.f32.gmra.mrb[0].mxu0 %v878
      %v880 = vpop.f32.mrb[0].mxu0
      %v881 = vadd.f32 %v807, %v880
      %v882 = vpop.f32.mrb[0].mxu0
      %883 = vdwg.mxu0
      %884 = vmatprep.subr.mxu0 0.0
      %v885 = vand.u32 %v582, 4294901760
      %v886 = vsub.f32 %v582, %v885
      %v887 = vand.u32 %v886, 4294901760
      %888 = vmatpush1.xpose.msra.mxu0 %v887
      %889 = vmatprep.subr.mxu0 0.0
      %890 = vmatpush1.xpose.msra.mxu0 0.0
      %891 = vmatprep.subr.mxu0 0.0
      %892 = vmatpush1.xpose.msra.mxu0 0.0
      %893 = vmatprep.subr.mxu0 0.0
      %894 = vmatpush1.xpose.msra.mxu0 0.0
      %895 = vmatprep.subr.mxu0 0.0
      %896 = vmatpush1.xpose.msra.mxu0 0.0
      %897 = vmatprep.subr.mxu0 0.0
      %898 = vmatpush1.xpose.msra.mxu0 0.0
      %899 = vmatprep.subr.mxu0 0.0
      %900 = vmatpush1.xpose.msra.mxu0 0.0
      %901 = vmatprep.subr.mxu0 0.0
      %902 = vmatpush1.xpose.msra.mxu0 0.0
      %903 = vmatprep.subr.mxu0 0.0
      %904 = vmatpush1.xpose.msra.mxu0 0.0
      %905 = vmatprep.subr.mxu0 0.0
      %906 = vmatpush1.xpose.msra.mxu0 0.0
      %907 = vmatprep.subr.mxu0 0.0
      %908 = vmatpush1.xpose.msra.mxu0 0.0
      %909 = vmatprep.subr.mxu0 0.0
      %910 = vmatpush1.xpose.msra.mxu0 0.0
      %911 = vmatprep.subr.mxu0 0.0
      %912 = vmatpush1.xpose.msra.mxu0 0.0
      %913 = vmatprep.subr.mxu0 0.0
      %914 = vmatpush1.xpose.msra.mxu0 0.0
      %915 = vmatprep.subr.mxu0 0.0
      %916 = vmatpush1.xpose.msra.mxu0 0.0
      %917 = vmatprep.subr.mxu0 0.0
      %918 = vmatpush1.xpose.msra.mxu0 0.0
      %919 = vmatprep.subr.mxu0 0.0
      %920 = vmatpush1.xpose.msra.mxu0 0.0
      %921 = vmatprep.subr.mxu0 0.0
      %922 = vmatpush1.xpose.msra.mxu0 0.0
      %923 = vmatprep.subr.mxu0 0.0
      %924 = vmatpush1.xpose.msra.mxu0 0.0
      %925 = vmatprep.subr.mxu0 0.0
      %926 = vmatpush1.xpose.msra.mxu0 0.0
      %927 = vmatprep.subr.mxu0 0.0
      %928 = vmatpush1.xpose.msra.mxu0 0.0
      %929 = vmatprep.subr.mxu0 0.0
      %930 = vmatpush1.xpose.msra.mxu0 0.0
      %931 = vmatprep.subr.mxu0 0.0
      %932 = vmatpush1.xpose.msra.mxu0 0.0
      %933 = vmatprep.subr.mxu0 0.0
      %934 = vmatpush1.xpose.msra.mxu0 0.0
      %935 = vmatprep.subr.mxu0 0.0
      %936 = vmatpush1.xpose.msra.mxu0 0.0
      %937 = vmatprep.subr.mxu0 0.0
      %938 = vmatpush1.xpose.msra.mxu0 0.0
      %939 = vmatprep.subr.mxu0 0.0
      %940 = vmatpush1.xpose.msra.mxu0 0.0
      %941 = vmatprep.subr.mxu0 0.0
      %942 = vmatpush1.xpose.msra.mxu0 0.0
      %943 = vmatprep.subr.mxu0 0.0
      %944 = vmatpush1.xpose.msra.mxu0 0.0
      %945 = vmatprep.subr.mxu0 0.0
      %946 = vmatpush1.xpose.msra.mxu0 0.0
      %947 = vmatprep.subr.mxu0 0.0
      %948 = vmatpush1.xpose.msra.mxu0 0.0
      %949 = vmatprep.subr.mxu0 0.0
      %950 = vmatpush1.xpose.msra.mxu0 0.0
      %951 = vmatprep.mubr.f32.mxu0 0.0
      %v952 = vand.u32 %v578, 4294901760
      %953 = vmatmul.mubr.f32.gmra.mrb[0].mxu0 %v952
      %v954 = vpop.f32.mrb[0].mxu0
      %v955 = vadd.f32 %v881, %v954
      %v956 = vpop.f32.mrb[0].mxu0
      %957 = vdwg.mxu0
      %958 = vmatprep.subr.mxu0 0.0
      %v959 = vand.u32 %v582, 4294901760
      %960 = vmatpush1.xpose.msra.mxu0 %v959
      %961 = vmatprep.subr.mxu0 0.0
      %962 = vmatpush1.xpose.msra.mxu0 0.0
      %963 = vmatprep.subr.mxu0 0.0
      %964 = vmatpush1.xpose.msra.mxu0 0.0
      %965 = vmatprep.subr.mxu0 0.0
      %966 = vmatpush1.xpose.msra.mxu0 0.0
      %967 = vmatprep.subr.mxu0 0.0
      %968 = vmatpush1.xpose.msra.mxu0 0.0
      %969 = vmatprep.subr.mxu0 0.0
      %970 = vmatpush1.xpose.msra.mxu0 0.0
      %971 = vmatprep.subr.mxu0 0.0
      %972 = vmatpush1.xpose.msra.mxu0 0.0
      %973 = vmatprep.subr.mxu0 0.0
      %974 = vmatpush1.xpose.msra.mxu0 0.0
      %975 = vmatprep.subr.mxu0 0.0
      %976 = vmatpush1.xpose.msra.mxu0 0.0
      %977 = vmatprep.subr.mxu0 0.0
      %978 = vmatpush1.xpose.msra.mxu0 0.0
      %979 = vmatprep.subr.mxu0 0.0
      %980 = vmatpush1.xpose.msra.mxu0 0.0
      %981 = vmatprep.subr.mxu0 0.0
      %982 = vmatpush1.xpose.msra.mxu0 0.0
      %983 = vmatprep.subr.mxu0 0.0
      %984 = vmatpush1.xpose.msra.mxu0 0.0
      %985 = vmatprep.subr.mxu0 0.0
      %986 = vmatpush1.xpose.msra.mxu0 0.0
      %987 = vmatprep.subr.mxu0 0.0
      %988 = vmatpush1.xpose.msra.mxu0 0.0
      %989 = vmatprep.subr.mxu0 0.0
      %990 = vmatpush1.xpose.msra.mxu0 0.0
      %991 = vmatprep.subr.mxu0 0.0
      %992 = vmatpush1.xpose.msra.mxu0 0.0
      %993 = vmatprep.subr.mxu0 0.0
      %994 = vmatpush1.xpose.msra.mxu0 0.0
      %995 = vmatprep.subr.mxu0 0.0
      %996 = vmatpush1.xpose.msra.mxu0 0.0
      %997 = vmatprep.subr.mxu0 0.0
      %998 = vmatpush1.xpose.msra.mxu0 0.0
      %999 = vmatprep.subr.mxu0 0.0
      %1000 = vmatpush1.xpose.msra.mxu0 0.0
      %1001 = vmatprep.subr.mxu0 0.0
      %1002 = vmatpush1.xpose.msra.mxu0 0.0
      %1003 = vmatprep.subr.mxu0 0.0
      %1004 = vmatpush1.xpose.msra.mxu0 0.0
      %1005 = vmatprep.subr.mxu0 0.0
      %1006 = vmatpush1.xpose.msra.mxu0 0.0
      %1007 = vmatprep.subr.mxu0 0.0
      %1008 = vmatpush1.xpose.msra.mxu0 0.0
      %1009 = vmatprep.subr.mxu0 0.0
      %1010 = vmatpush1.xpose.msra.mxu0 0.0
      %1011 = vmatprep.subr.mxu0 0.0
      %1012 = vmatpush1.xpose.msra.mxu0 0.0
      %1013 = vmatprep.subr.mxu0 0.0
      %1014 = vmatpush1.xpose.msra.mxu0 0.0
      %1015 = vmatprep.subr.mxu0 0.0
      %1016 = vmatpush1.xpose.msra.mxu0 0.0
      %1017 = vmatprep.subr.mxu0 0.0
      %1018 = vmatpush1.xpose.msra.mxu0 0.0
      %1019 = vmatprep.subr.mxu0 0.0
      %1020 = vmatpush1.xpose.msra.mxu0 0.0
      %1021 = vmatprep.subr.mxu0 0.0
      %1022 = vmatpush1.xpose.msra.mxu0 0.0
      %1023 = vmatprep.mubr.f32.mxu0 0.0
      %v1024 = vand.u32 %v578, 4294901760
      %1025 = vmatmul.mubr.f32.gmra.mrb[0].mxu0 %v1024
      %v1026 = vpop.f32.mrb[0].mxu0
      %v1027 = vadd.f32 %v955, %v1026
      %v1028 = vpop.f32.mrb[0].mxu0
      %1029 = vdwg.mxu0
      %v1030 = vadd.f32 %v583, %v1027
      %vm1031 = vcmask 17408
      %1032 = vst.msk [vmem:[#allocation2] sm:$0x3] %vm1031, %v1030
    $region29: #{tpu_custom_call.1} parent=1 // pred_fallthru
      _
    // Predicated region
    $region30: #{tpu_custom_call.1} parent=1 // pred_check
      %p1033 = pneg %p84
    $region31: #{tpu_custom_call.1} parent=1 // pred_check_branch
      %1035 = sbr.rel (%p1033) target = $region33
    $region32: #{tpu_custom_call.1} parent=1 // pred_region
      %v1036 = vld [vmem:[#allocation2] sm:$0x3]
      %vm1037 = vcmask 17408
      %1038 = vst.msk [vmem:[#allocation7] sm:$0x3] %vm1037, %v1036
    $region33: #{tpu_custom_call.1} parent=1 // pred_fallthru
      _
    // Predicated region
    $region34: #{tpu_custom_call.1} parent=1 // pred_check
      _
    $region35: #{tpu_custom_call.1} parent=1 // pred_check_branch
      %1040 = sbr.rel (0) target = $region37
    $region36: #{tpu_custom_call.1} parent=1 // pred_region
      %s1042 = ssub.s32 32, 32
      %1043 = vsyncadd [#allocation6], %s1042
      %s1045 = sshll.u32 [#allocation7], 4
      %s1046 = int_to_ptr.vmem [resolvable:$true] %s1045
      %1048 = dma.vmem_to_hbm [thread:$0]  %s1046, 32, %s3, [#allocation6]
    $region37: #{tpu_custom_call.1} parent=1 // pred_fallthru
      _
    // Predicated region
    $region38: #{tpu_custom_call.1} parent=1 // pred_check
      _
    $region39: #{tpu_custom_call.1} parent=1 // pred_check_branch
      %1050 = sbr.rel (0) target = $region41
    $region40: #{tpu_custom_call.1} parent=1 // pred_region
      %1051 = dma.done [#allocation6], 32
    $region41: #{tpu_custom_call.1} parent=1 // pred_fallthru
      _
    %1052 = vsyncpa [#allocation5], 1
    %1053 = vsyncpa [#allocation6], 1

</llo_original>
